<compile_context>
chip_gen: v6e
topology: v6e:2x2x1
jax: 0.10.0
libtpu: 0.0.40
codegen_flags: <defaults>
</compile_context>

<pallas_src>
import math

import jax
import jax.numpy as jnp
from jax.experimental import pallas as pl
from jax.experimental.pallas import tpu as pltpu

_SHIFT = math.log(2.0)

_MAX_TILE_ELEMS = 1 << 20          # 1M elems: 4 MiB f32 / 2 MiB bf16 per buffer
_LANE_WIDTHS = (1024, 512, 256, 128)
_VMEM_LIMIT_BYTES = 32 * 1024 * 1024   # ~2x the 4-buffer footprint; safe on v7x

_PALLAS_DTYPES = (jnp.dtype(jnp.float32), jnp.dtype(jnp.bfloat16),
                  jnp.dtype(jnp.float16))


def _round_up(a, b):
    return ((a + b - 1) // b) * b


def _shifted_softplus_kernel(x_ref, o_ref):
    # Upcast to f32 in registers (no bf16 VPU needed on v5e); numerically stable
    # softplus: max(x,0) + log1p(exp(-|x|)).  exp/log1p ride the EUP slot.
    x = x_ref[...].astype(jnp.float32)
    sp = jnp.maximum(x, 0.0) + jnp.log1p(jnp.exp(-jnp.abs(x)))
    o_ref[...] = (sp - _SHIFT).astype(o_ref.dtype)


def _reference(x):
    # Pure-JAX reference mirroring torch.nn.functional.softplus(x) - log(2).
    xf = x.astype(jnp.float32)
    return (jnp.logaddexp(xf, 0.0) - _SHIFT).astype(x.dtype)


def shifted_softplus(x):
    """Pallas TPU implementation of ShiftedSoftplus.forward: softplus(x) - log(2).

    Works for any input shape; result has the same shape and dtype as `x`.
    """
    orig_shape = x.shape
    orig_dtype = jnp.dtype(x.dtype)
    n = x.size
    if n == 0:
        return x
    if orig_dtype not in _PALLAS_DTYPES:
        # e.g. float64 under x64, or integer inputs: fall back to pure JAX.
        return _reference(x)

    itemsize = orig_dtype.itemsize
    sub = max(8, 32 // itemsize)       # sublane quantum: 8 (f32) / 16 (bf16,f16)

    # Pick a lane-dense width that divides n (no padding in the common case).
    width = None
    for w in _LANE_WIDTHS:
        if n % w == 0:
            width = w
            break
    if width is None:
        # Rare truly-unaligned case: pad to the next multiple of 128.
        # TODO(synk): for very large unaligned inputs a prefix/tail split would
        # avoid this extra pad/slice pass.
        width = 128
    n_pad = _round_up(n, width)

    flat = x.reshape(-1)
    if n_pad != n:
        flat = jnp.pad(flat, (0, n_pad - n))
    rows = n_pad // width
    x2d = flat.reshape(rows, width)

    # Tile rows: as large as the VMEM budget allows, sublane-aligned.
    max_tile_rows = max(sub, (( _MAX_TILE_ELEMS // width) // sub) * sub)
    if rows < sub:
        tile_rows = rows                       # full-dim block (always legal)
    else:
        tile_rows = min(max_tile_rows, (rows // sub) * sub)
        if rows >= 4 * sub:
            # Keep >= ~4 grid steps so the pipeline overlaps DMA/compute and
            # v7x's two TensorCores can split the parallel axis.
            tile_rows = min(tile_rows, _round_up(pl.cdiv(rows, 4), sub))

    grid = (pl.cdiv(rows, tile_rows),)

    out2d = pl.pallas_call(
        _shifted_softplus_kernel,
        out_shape=jax.ShapeDtypeStruct((rows, width), orig_dtype),
        grid_spec=pltpu.PrefetchScalarGridSpec(
            num_scalar_prefetch=0,
            grid=grid,
            in_specs=[pl.BlockSpec((tile_rows, width), lambda i: (i, 0))],
            out_specs=pl.BlockSpec((tile_rows, width), lambda i: (i, 0)),
        ),
        compiler_params=pltpu.CompilerParams(
            dimension_semantics=("parallel",),   # shard steps across TCs on v7x
            vmem_limit_bytes=_VMEM_LIMIT_BYTES,
        ),
    )(x2d)

    out = out2d.reshape(-1)
    if n_pad != n:
        out = out[:n]
    return out.reshape(orig_shape)


if __name__ == "__main__":
    key = jax.random.PRNGKey(0)

    # Small 4-D activation tensor (elementwise op, any shape is valid).
    x = jax.random.normal(key, (2, 4, 16, 16), dtype=jnp.float32) * 3.0
    out = shifted_softplus(x)
    jax.block_until_ready(out)
    ref = _reference(x)
    assert out.shape == x.shape and out.dtype == x.dtype
    assert jnp.allclose(out, ref, atol=1e-6, rtol=1e-6)

    # Non-128-aligned 1-D size: exercises the pad/slice path.
    x1 = jax.random.normal(jax.random.PRNGKey(1), (1000,), dtype=jnp.float32) * 5.0
    out1 = shifted_softplus(x1)
    jax.block_until_ready(out1)
    assert jnp.allclose(out1, _reference(x1), atol=1e-6, rtol=1e-6)

    # bf16 input: exercises native-dtype streaming + 16-row sublane quantum.
    x2 = (jax.random.normal(jax.random.PRNGKey(2), (3, 5, 256)) * 2.0).astype(jnp.bfloat16)
    out2 = shifted_softplus(x2)
    jax.block_until_ready(out2)
    assert out2.dtype == jnp.bfloat16 and out2.shape == x2.shape
    assert jnp.allclose(out2.astype(jnp.float32),
                        _reference(x2).astype(jnp.float32),
                        atol=2e-2, rtol=2e-2)

    print("KERNEL_OK")
</pallas_src>

<mosaic_0001>
module attributes {stable_mosaic.version = 11 : i64} {
  func.func @_shifted_softplus_kernel(%arg0: i32, %arg1: memref<2x1024xf32, #tpu.memory_space<vmem>>, %arg2: memref<2x1024xf32, #tpu.memory_space<vmem>>) attributes {dimension_semantics = [#tpu.dimension_semantics<parallel>], iteration_bounds = array<i64: 1>, scalar_prefetch = 0 : i64, scratch_operands = 0 : i64, tpu.core_type = #tpu.core_type<tc>, window_params = [{transform_indices = @transform_0, window_bounds = array<i64: 2, 1024>}, {transform_indices = @transform_1, window_bounds = array<i64: 2, 1024>}]} {
    %c0 = arith.constant 0 : index
    %c0_0 = arith.constant 0 : index
    %0 = vector.load %arg1[%c0, %c0_0] : memref<2x1024xf32, #tpu.memory_space<vmem>>, vector<2x1024xf32>
    %cst = arith.constant 0.000000e+00 : f32
    %1 = vector.broadcast %cst : f32 to vector<2x1024xf32>
    %2 = arith.maximumf %0, %1 : vector<2x1024xf32>
    %3 = math.absf %0 : vector<2x1024xf32>
    %cst_1 = arith.constant 0.000000e+00 : f32
    %4 = vector.broadcast %cst_1 : f32 to vector<2x1024xf32>
    %5 = arith.subf %4, %3 : vector<2x1024xf32>
    %6 = math.exp %5 : vector<2x1024xf32>
    %7 = math.log1p %6 : vector<2x1024xf32>
    %8 = arith.addf %2, %7 : vector<2x1024xf32>
    %cst_2 = arith.constant 0.693147182 : f32
    %9 = vector.broadcast %cst_2 : f32 to vector<2x1024xf32>
    %10 = arith.subf %8, %9 : vector<2x1024xf32>
    %c0_3 = arith.constant 0 : index
    %c0_4 = arith.constant 0 : index
    %11 = vector.load %arg2[%c0_3, %c0_4] : memref<2x1024xf32, #tpu.memory_space<vmem>>, vector<2x1024xf32>
    tpu.vector_store %arg2[%c0_3, %c0_4], %10 {strides = array<i32>} : memref<2x1024xf32, #tpu.memory_space<vmem>>, vector<2x1024xf32>,
    return
  }
  func.func @transform_0(%arg0: i32) -> (i32, i32) {
    %c0_i32 = arith.constant 0 : i32
    %c0_i32_0 = arith.constant 0 : i32
    return %arg0, %c0_i32 : i32, i32
  }
  func.func @transform_1(%arg0: i32) -> (i32, i32) {
    %c0_i32 = arith.constant 0 : i32
    %c0_i32_0 = arith.constant 0 : i32
    return %arg0, %c0_i32 : i32, i32
  }
}

</mosaic_0001>

<llo_original>
// kernel: tpu_custom_call.1
$region0: #{tpu_custom_call.1}
  #allocation0 [shape = 'u32[]', space=smem, size = 0x4, offset = 0x4, fixed_abs, tag = 'smem constant byte address 0x4 - core index']
  #allocation1 [shape = 'u32[144,128]{1,0:T(1,128)}', space=vmem, size = 0x12000, scoped, tag = 'internal scratch']
  %s0 = inlined_call_operand.hbm [shape: f32[2,1024], index: 0, kind: input, shape index: {}]
  %s1 = inlined_call_operand.hbm [shape: f32[2,1024], index: 1, kind: output, shape index: {}]
  %s2 = sld [smem:[#allocation0]]
  $region18: #{tpu_custom_call.1} parent=0
    _
  %s4 = ssub.s32 1, %s2
  %s5 = scalar_select 0, %s4, %s2
  $region1: #{tpu_custom_call.1} parent=0
    #allocation2 [shape = 'u8[8192]{0}', space=vmem, size = 0x2000, scoped, tag = 'input window, operand 0, single buffered']
    #allocation3 [shape = 's32[1]{0}', space=sflag, size = 0x4, scoped, tag = 'scoped memory for tpu_custom_call.1']
    #allocation4 [shape = 's32[1]{0}', space=sflag, size = 0x4, scoped, tag = 'scoped memory for tpu_custom_call.1']
    #allocation5 [shape = 'u8[8192]{0}', space=vmem, size = 0x2000, scoped, tag = 'output window, operand 0, single buffered']
    %6 = vsyncpa [#allocation3], 0
    %7 = vsyncpa [#allocation4], 0
    // Predicated region
    $region2: #{tpu_custom_call.1} parent=1 // pred_check
      _
    $region3: #{tpu_custom_call.1} parent=1 // pred_check_branch
      %9 = sbr.rel (0) target = $region5
    $region4: #{tpu_custom_call.1} parent=1 // pred_region
      %s11 = ssub.s32 256, 256
      %12 = vsyncadd [#allocation3], %s11
      %s14 = sshll.u32 [#allocation2], 4
      %s15 = int_to_ptr.vmem [resolvable:$true] %s14
      %17 = dma.hbm_to_vmem [thread:$0]  %s0, 256, %s15, [#allocation3]
    $region5: #{tpu_custom_call.1} parent=1 // pred_fallthru
      _
    // Predicated region
    $region6: #{tpu_custom_call.1} parent=1 // pred_check
      _
    $region7: #{tpu_custom_call.1} parent=1 // pred_check_branch
      %19 = sbr.rel (0) target = $region9
    $region8: #{tpu_custom_call.1} parent=1 // pred_region
      %20 = dma.done [#allocation3], 256
    $region9: #{tpu_custom_call.1} parent=1 // pred_fallthru
      _
    %v21 = vld [vmem:[#allocation2] sm:$0xff]
    %v22 = vld [vmem:[#allocation2 + $0x8] sm:$0xff]
    %v23 = vmax.f32 %v21, 0.0
    %v24 = vmax.f32 %v22, 0.0
    %v25 = vand.u32 2147483647, %v21
    %v26 = vand.u32 2147483647, %v22
    %v27 = vsub.f32 0.0, %v25
    %v28 = vsub.f32 0.0, %v26
    %v29 = vmul.f32 %v27, 1.442695
    %v30 = vpow.pop %v29
    %v31 = vmul.f32 %v28, 1.442695
    %v32 = vpow.pop %v31
    %v33 = vadd.f32 %v30, 1.0
    %v34 = vlog2.pop %v33
    %v35 = vmul.f32 %v34, 0.6931472
    %v36 = vmul.f32 -0.5, %v30
    %v37 = vadd.f32 %v36, 1.0
    %v38 = vmul.f32 %v37, %v30
    %v39 = vand.u32 2147483647, %v30
    %vm40 = vcmp.lt.f32.partialorder %v39, 0.0004427343
    %v41 = vsel %vm40, %v38, %v35
    %v42 = vadd.f32 %v32, 1.0
    %v43 = vlog2.pop %v42
    %v44 = vmul.f32 %v43, 0.6931472
    %v45 = vmul.f32 -0.5, %v32
    %v46 = vadd.f32 %v45, 1.0
    %v47 = vmul.f32 %v46, %v32
    %v48 = vand.u32 2147483647, %v32
    %vm49 = vcmp.lt.f32.partialorder %v48, 0.0004427343
    %v50 = vsel %vm49, %v47, %v44
    %v51 = vadd.f32 %v23, %v41
    %v52 = vadd.f32 %v24, %v50
    %v53 = vsub.f32 %v51, 0.6931472
    %v54 = vsub.f32 %v52, 0.6931472
    %55 = vst [vmem:[#allocation5] sm:$0xff] %v53
    %56 = vst [vmem:[#allocation5 + $0x8] sm:$0xff] %v54
    // Predicated region
    $region10: #{tpu_custom_call.1} parent=1 // pred_check
      _
    $region11: #{tpu_custom_call.1} parent=1 // pred_check_branch
      %58 = sbr.rel (0) target = $region13
    $region12: #{tpu_custom_call.1} parent=1 // pred_region
      %s60 = ssub.s32 256, 256
      %61 = vsyncadd [#allocation4], %s60
      %s63 = sshll.u32 [#allocation5], 4
      %s64 = int_to_ptr.vmem [resolvable:$true] %s63
      %66 = dma.vmem_to_hbm [thread:$0]  %s64, 256, %s1, [#allocation4]
    $region13: #{tpu_custom_call.1} parent=1 // pred_fallthru
      _
    // Predicated region
    $region14: #{tpu_custom_call.1} parent=1 // pred_check
      _
    $region15: #{tpu_custom_call.1} parent=1 // pred_check_branch
      %68 = sbr.rel (0) target = $region17
    $region16: #{tpu_custom_call.1} parent=1 // pred_region
      %69 = dma.done [#allocation4], 256
    $region17: #{tpu_custom_call.1} parent=1 // pred_fallthru
      _
    %70 = vsyncpa [#allocation3], 1
    %71 = vsyncpa [#allocation4], 1

</llo_original>
